<compile_context>
chip_gen: v5e
topology: v5e:2x2
jax: 0.10.0
libtpu: 0.0.40
codegen_flags: <defaults>
</compile_context>

<pallas_src>
import functools
import numpy as np
import jax
import jax.numpy as jnp
from jax.experimental import pallas as pl
from jax.experimental.pallas import tpu as pltpu

KERNEL_DIM = 128   # self.kernel_dim
M_DIM = 16         # self.m_dim
EMB_DIM = 64       # self.embeddings_dim

# Explicit scoped-VMEM limit: safe on v5e/v6e and within v7x's 64 MiB physical.
VMEM_LIMIT = 32 * 1024 * 1024


def _round_up(x, m):
    return (x + m - 1) // m * m


def _cparams(sem):
    return pltpu.CompilerParams(dimension_semantics=tuple(sem),
                                vmem_limit_bytes=VMEM_LIMIT)


def _pick_tile(m, tmax=512):
    """Row tile: multiple of 16 (bf16-safe), near-divisor of m, >=2 blocks when big."""
    g = 16
    mg = _round_up(max(int(m), 1), g)
    if mg < 64:
        return mg
    nblk = max(2, -(-mg // tmax))
    return _round_up(-(-mg // nblk), g)


def _pick_gpb(nb):
    """Graphs per MAB block: >=2 grid steps when possible, capped for VMEM."""
    return max(1, min(8, -(-nb // 2)))


# ----------------------------- in-kernel helpers -----------------------------

def _mm(x, w_bf16):
    """bf16 x bf16 MXU matmul with f32 accumulation."""
    return jnp.dot(x.astype(jnp.bfloat16), w_bf16, preferred_element_type=jnp.float32)


def _mm3(x3, w_bf16):
    """(G,S,K) x (K,N) matmul via a leading-dim collapse (S is a multiple of 8)."""
    g, s, k = x3.shape
    y = jnp.dot(x3.reshape(g * s, k).astype(jnp.bfloat16), w_bf16,
                preferred_element_type=jnp.float32)
    return y.reshape(g, s, w_bf16.shape[1])


def _act(x, act):
    if act == "silu":
        return x * jax.nn.sigmoid(x)
    if act == "relu":
        return jnp.maximum(x, 0.0)
    return x


def _ln(x, w, b, d, eps=1e-5):
    """LayerNorm over the last dim. Stats use sums over ALL lanes / d, which is exact
    because any padded lanes of x are exactly zero; no iota/where masking needed."""
    x = x.astype(jnp.float32)
    inv_d = 1.0 / d
    mean = jnp.sum(x, axis=-1, keepdims=True) * inv_d
    var = jnp.sum(x * x, axis=-1, keepdims=True) * inv_d - mean * mean
    return (x - mean) * jax.lax.rsqrt(var + eps) * w + b


# ----------------------------- fused kernels -----------------------------

def _linear_kernel(x_ref, w, b, o_ref, *, act):
    o_ref[...] = _act(_mm(x_ref[...], w[...]) + b[...], act).astype(o_ref.dtype)


def _mlp2_kernel(x_ref, w1, b1, w2, b2, o_ref, *, act1, act2):
    h = _act(_mm(x_ref[...], w1[...]) + b1[...], act1)
    o_ref[...] = _act(_mm(h, w2[...]) + b2[...], act2).astype(o_ref.dtype)


def _mlp3_kernel(x_ref, w1, b1, w2, b2, w3, b3, o_ref, *, act_last):
    h = _act(_mm(x_ref[...], w1[...]) + b1[...], "silu")
    h = _act(_mm(h, w2[...]) + b2[...], "silu")
    o_ref[...] = _act(_mm(h, w3[...]) + b3[...],
                      "silu" if act_last else None).astype(o_ref.dtype)


def _egnn_edge_kernel(cat_ref, w1, b1, w2, b2, lnw, lnb, o_ref, *, m_dim):
    # edge_mlp: Linear -> SiLU -> Linear -> SiLU, then edge_norm1 (LayerNorm(m_dim)).
    # Grid axis 1 = kernel index (weights stacked); cat_e block stays resident across it.
    h = _act(_mm(cat_ref[...], w1[0]) + b1[0], "silu")
    h = _act(_mm(h, w2[0]) + b2[0], "silu")
    h = _ln(h, lnw[0], lnb[0], m_dim)
    o_ref[0] = h[:, :m_dim].astype(o_ref.dtype)   # store true m_dim lanes only


def _egnn_node_kernel(x_ref, m_ref, e2w, e2b, n1w, n1b, w1x, w1m, b1, w2, b2,
                      n2w, n2b, o_ref, *, f, m_dim):
    x = x_ref[...].astype(jnp.float32)
    m_i = _ln(m_ref[0], e2w[0], e2b[0], m_dim)                  # edge_norm2
    h = _ln(x, n1w[0], n1b[0], f)                               # node_norm1
    # node_mlp on concat([h, m_i]) realised as a split matmul (no in-kernel concat).
    z = _act(_mm(h, w1x[0]) + _mm(m_i, w1m[0]) + b1[0], "silu")
    z = _mm(z, w2[0]) + b2[0]
    z = _ln(z, n2w[0], n2b[0], f)                               # node_norm2
    o_ref[...] = (x + z).astype(o_ref.dtype)                    # residual


def _graphconv_kernel(agg_ref, x_ref, wrel, brel, wroot, o_ref):
    # torch_geometric GraphConv: lin_rel(aggregated) + lin_root(x) (root has no bias).
    # K and V GraphConvs are fused via column-concatenated weights (out width 256).
    o_ref[...] = (_mm(agg_ref[...], wrel[...]) + brel[...]
                  + _mm(x_ref[...], wroot[...])).astype(o_ref.dtype)


def _mab_core(qb, k, v, mask, wo, bo, l0w, l0b, l1w, l1b, scale):
    # TODO(synk): some torch_geometric GMT versions softmax over the seed axis (dim=1);
    # we softmax over the key axis so the padding mask is meaningful.
    att = jnp.einsum("gqd,gkd->gqk", qb.astype(jnp.bfloat16), k.astype(jnp.bfloat16),
                     preferred_element_type=jnp.float32) * scale + mask
    att = att - jnp.max(att, axis=-1, keepdims=True)
    p = jnp.exp(att)
    a = p * pl.reciprocal(jnp.sum(p, axis=-1, keepdims=True), approx=True)
    out = qb + jnp.einsum("gqk,gkd->gqd", a.astype(jnp.bfloat16), v.astype(jnp.bfloat16),
                          preferred_element_type=jnp.float32)
    out = _ln(out, l0w, l0b, out.shape[-1])
    out = out + jnp.maximum(_mm3(out, wo) + bo, 0.0)
    return _ln(out, l1w, l1b, out.shape[-1])


def _mab_g_kernel(kv_ref, mask_ref, qf, wo, bo, l0w, l0b, l1w, l1b, o_ref, *, d, scale):
    # GMPool_G: K/V from the fused GraphConv; Q = fc_q(S_g) precomputed (resident).
    kv = kv_ref[...]
    g = kv.shape[0]
    qb = jnp.broadcast_to(qf[...][None].astype(jnp.float32), (g,) + qf.shape)
    out = _mab_core(qb, kv[:, :, :d], kv[:, :, d:], mask_ref[...],
                    wo[...], bo[...], l0w[...], l0b[...], l1w[...], l1b[...], scale)
    o_ref[...] = out.astype(o_ref.dtype)


def _mab_self_kernel(x_ref, wq, bq, wkv, bkv, wo, bo, l0w, l0b, l1w, l1b, o_ref,
                     *, d, sk, scale):
    # SelfAtt: Q == K/V source == previous pooled state; K/V projection fused (width 2d).
    x = x_ref[...]
    qb = _mm3(x, wq[...]) + bq[...]
    kv = _mm3(x, wkv[...]) + bkv[...]
    col = jax.lax.broadcasted_iota(jnp.int32, (1, 1, x.shape[1]), 2)
    mask = jnp.where(col < sk, 0.0, -1e9)
    out = _mab_core(qb, kv[:, :, :d], kv[:, :, d:], mask,
                    wo[...], bo[...], l0w[...], l0b[...], l1w[...], l1b[...], scale)
    o_ref[...] = out.astype(o_ref.dtype)


def _mab_i_kernel(x_ref, qf, wkv, bkv, wo, bo, l0w, l0b, l1w, l1b, w2, b2, o_ref,
                  *, d, sk, scale):
    # GMPool_I with the head's lin2 fused in; Q = fc_q(S_i) precomputed (resident).
    x = x_ref[...]
    g = x.shape[0]
    kv = _mm3(x, wkv[...]) + bkv[...]
    qb = jnp.broadcast_to(qf[...][None].astype(jnp.float32), (g,) + qf.shape)
    col = jax.lax.broadcasted_iota(jnp.int32, (1, 1, x.shape[1]), 2)
    mask = jnp.where(col < sk, 0.0, -1e9)
    out = _mab_core(qb, kv[:, :, :d], kv[:, :, d:], mask,
                    wo[...], bo[...], l0w[...], l0b[...], l1w[...], l1b[...], scale)
    y = _mm3(out, w2[...]) + b2[...]
    o_ref[...] = y[:, 0:1, :].astype(o_ref.dtype)


def _post_pool_kernel(x_ref, w1, b1, w2, b2, w3, b3, o_ref):
    # Both post-pooling MLPs run in one call: grid over the MLP index, weights stacked.
    h = _act(_mm(x_ref[...], w1[0]) + b1[0], "silu")
    h = _act(_mm(h, w2[0]) + b2[0], "silu")
    o_ref[0] = (_mm(h, w3[0]) + b3[0]).astype(o_ref.dtype)


# ----------------------------- pallas_call wrappers -----------------------------

def _row_call(kernel, row_arrays, resident, out_cols, tile, out_dtype=jnp.bfloat16):
    """1-D 'parallel' row grid over pre-padded rows; weights resident (constant index_map)."""
    mp = row_arrays[0].shape[0]
    in_specs = ([pl.BlockSpec((tile, a.shape[1]), lambda i: (i, 0)) for a in row_arrays]
                + [pl.BlockSpec(a.shape, lambda i: (0, 0)) for a in resident])
    return pl.pallas_call(
        kernel,
        out_shape=jax.ShapeDtypeStruct((mp, out_cols), out_dtype),
        grid=(mp // tile,),
        in_specs=in_specs,
        out_specs=pl.BlockSpec((tile, out_cols), lambda i: (i, 0)),
        compiler_params=_cparams(("parallel",)),
    )(*row_arrays, *resident)


def _mab_call(kernel, batched, resident, out_tail, out_dtype, gpb):
    """Grid over blocks of `gpb` graphs; per-block batched tensors, params resident."""
    nbp = batched[0].shape[0]
    in_specs = ([pl.BlockSpec((gpb,) + a.shape[1:], lambda i: (i, 0, 0)) for a in batched]
                + [pl.BlockSpec(a.shape, lambda i: (0, 0)) for a in resident])
    return pl.pallas_call(
        kernel,
        out_shape=jax.ShapeDtypeStruct((nbp,) + out_tail, out_dtype),
        grid=(nbp // gpb,),
        in_specs=in_specs,
        out_specs=pl.BlockSpec((gpb,) + out_tail, lambda i: (i, 0, 0)),
        compiler_params=_cparams(("parallel",)),
    )(*batched, *resident)


def _scatter_add(data, idx, num_segments):
    # Out-of-range indices (padded edges) are explicitly dropped.
    return jnp.zeros((num_segments,) + data.shape[1:], data.dtype).at[idx].add(
        data, mode="drop")


# ----------------------------- parameter init (pre-padded, bf16 weights) -----------------------------

class KeyGen:
    def __init__(self, seed=0):
        self._key = jax.random.PRNGKey(seed)

    def __call__(self):
        self._key, sub = jax.random.split(self._key)
        return sub


def glorot(kg, shape):
    fan_in, fan_out = shape[-2], shape[-1]
    lim = float(np.sqrt(6.0 / (fan_in + fan_out)))
    return jax.random.uniform(kg(), shape, jnp.float32, -lim, lim)


def dense_params(kg, din, dout):
    w = glorot(kg, (din, dout))
    kp, np_ = _round_up(din, 128), _round_up(dout, 128)
    wp = jnp.zeros((kp, np_), jnp.float32).at[:din, :dout].set(w)
    return {"w": wp.astype(jnp.bfloat16), "b": jnp.zeros((1, np_), jnp.float32)}


def ln_params(d):
    dp = _round_up(d, 128)
    return {"w": jnp.zeros((1, dp), jnp.float32).at[0, :d].set(1.0),
            "b": jnp.zeros((1, dp), jnp.float32)}


def egnn_stacked_params(kg, f, m, nk):
    """All EGNN kernels' weights, stacked along a leading kernel axis for the fused calls."""
    mp128 = _round_up(m, 128)
    keys = ("e1w", "e1b", "e2w", "e2b", "ln1w", "ln1b", "ln2w", "ln2b",
            "nn1w", "nn1b", "n1wx", "n1wm", "n1b", "n2w", "n2b", "nn2w", "nn2b")
    acc = {k: [] for k in keys}
    for _ in range(nk):
        e1 = dense_params(kg, 2 * f, 4 * f)
        e2 = dense_params(kg, 4 * f, m)
        ln1, ln2 = ln_params(m), ln_params(m)
        nn1, nn2 = ln_params(f), ln_params(f)
        w = glorot(kg, (f + m, 2 * f))                     # node_mlp first Linear, split
        wx = w[:f]
        wm = jnp.zeros((mp128, 2 * f), jnp.float32).at[:m].set(w[f:])
        n2 = dense_params(kg, 2 * f, f)
        acc["e1w"].append(e1["w"]); acc["e1b"].append(e1["b"])
        acc["e2w"].append(e2["w"]); acc["e2b"].append(e2["b"])
        acc["ln1w"].append(ln1["w"]); acc["ln1b"].append(ln1["b"])
        acc["ln2w"].append(ln2["w"]); acc["ln2b"].append(ln2["b"])
        acc["nn1w"].append(nn1["w"]); acc["nn1b"].append(nn1["b"])
        acc["n1wx"].append(wx.astype(jnp.bfloat16))
        acc["n1wm"].append(wm.astype(jnp.bfloat16))
        acc["n1b"].append(jnp.zeros((1, 2 * f), jnp.float32))
        acc["n2w"].append(n2["w"]); acc["n2b"].append(n2["b"])
        acc["nn2w"].append(nn2["w"]); acc["nn2b"].append(nn2["b"])
    return {k: jnp.stack(v) for k, v in acc.items()}


def gmt_params(kg, d, num_seeds_g=75):
    # num_seeds_g = ceil(default num_nodes 300 * pooling_ratio 0.25) = 75
    sqp = _round_up(num_seeds_g, 8)
    S_g = jnp.zeros((sqp, d), jnp.float32).at[:num_seeds_g].set(glorot(kg, (num_seeds_g, d)))
    S_i = jnp.zeros((8, d), jnp.float32).at[:1].set(glorot(kg, (1, d)))
    lin1 = dense_params(kg, d, d)
    lin2 = dense_params(kg, d, d)
    gk_rel, gk_root = dense_params(kg, d, d), glorot(kg, (d, d))
    gv_rel, gv_root = dense_params(kg, d, d), glorot(kg, (d, d))
    mab_g_q = dense_params(kg, d, d)
    mab_g = {"fc_o": dense_params(kg, d, d), "ln0": ln_params(d), "ln1": ln_params(d)}
    sab_k, sab_v = dense_params(kg, d, d), dense_params(kg, d, d)
    mab_s = {"fc_q": dense_params(kg, d, d), "fc_o": dense_params(kg, d, d),
             "ln0": ln_params(d), "ln1": ln_params(d)}
    i_k, i_v = dense_params(kg, d, d), dense_params(kg, d, d)
    mab_i_q = dense_params(kg, d, d)
    mab_i = {"fc_o": dense_params(kg, d, d), "ln0": ln_params(d), "ln1": ln_params(d)}
    # graph-independent seed-query projections, hoisted out of the forward entirely
    qf_g = jnp.dot(S_g, mab_g_q["w"].astype(jnp.float32)) + mab_g_q["b"]
    qf_i = jnp.dot(S_i, mab_i_q["w"].astype(jnp.float32)) + mab_i_q["b"]
    return {
        "num_seeds": num_seeds_g,
        "lin1": lin1, "lin2": lin2,
        "gkv_rel_w": jnp.concatenate([gk_rel["w"], gv_rel["w"]], axis=1),
        "gkv_rel_b": jnp.concatenate([gk_rel["b"], gv_rel["b"]], axis=1),
        "gkv_root_w": jnp.concatenate([gk_root, gv_root], axis=1).astype(jnp.bfloat16),
        "qf_g": qf_g, "mab_g": mab_g,
        "sab_kv_w": jnp.concatenate([sab_k["w"], sab_v["w"]], axis=1),
        "sab_kv_b": jnp.concatenate([sab_k["b"], sab_v["b"]], axis=1),
        "mab_s": mab_s,
        "qf_i": qf_i,
        "i_kv_w": jnp.concatenate([i_k["w"], i_v["w"]], axis=1),
        "i_kv_b": jnp.concatenate([i_k["b"], i_v["b"]], axis=1),
        "mab_i": mab_i,
    }


def post_pool_params(kg, in_dim, rnn_dim, n_mlps=2):
    mlps = [[dense_params(kg, in_dim, rnn_dim),
             dense_params(kg, rnn_dim, rnn_dim),
             dense_params(kg, rnn_dim, rnn_dim)] for _ in range(n_mlps)]
    return {"w1": jnp.stack([m[0]["w"] for m in mlps]),
            "b1": jnp.stack([m[0]["b"] for m in mlps]),
            "w2": jnp.stack([m[1]["w"] for m in mlps]),
            "b2": jnp.stack([m[1]["b"] for m in mlps]),
            "w3": jnp.stack([m[2]["w"] for m in mlps]),
            "b3": jnp.stack([m[2]["b"] for m in mlps])}


def init_graph_transformer(seed=0, n_kernels=3, rnn_dim=256, property_dim=6, pooling_heads=2):
    kg = KeyGen(seed)
    return {
        "atom_emb": glorot(kg, (11, EMB_DIM)),
        "ring_emb": glorot(kg, (2, EMB_DIM)),
        "hyb_emb": glorot(kg, (4, EMB_DIM)),
        "arom_emb": glorot(kg, (2, EMB_DIM)),
        "pre_mlp": [dense_params(kg, EMB_DIM * 4, KERNEL_DIM * 2),
                    dense_params(kg, KERNEL_DIM * 2, KERNEL_DIM)],
        "egnn": egnn_stacked_params(kg, KERNEL_DIM, M_DIM, n_kernels),
        "post_mlp": [dense_params(kg, KERNEL_DIM * n_kernels, KERNEL_DIM),
                     dense_params(kg, KERNEL_DIM, KERNEL_DIM),
                     dense_params(kg, KERNEL_DIM, KERNEL_DIM)],
        "transformers": [gmt_params(kg, KERNEL_DIM) for _ in range(pooling_heads)],
        "mol_prop": dense_params(kg, property_dim, KERNEL_DIM),
        "post_pool": post_pool_params(kg, KERNEL_DIM * (pooling_heads + 1), rnn_dim),
    }


# ----------------------------- EGNN_sparse (3 kernels fused per stage) -----------------------------

def egnn_edge_messages(K, cat_e, te, Ep):
    nk = K["e1w"].shape[0]
    rs = lambda a: pl.BlockSpec((1,) + a.shape[1:], lambda i, k: (k, 0, 0))
    in_specs = [pl.BlockSpec((te, cat_e.shape[1]), lambda i, k: (i, 0)),
                rs(K["e1w"]), rs(K["e1b"]), rs(K["e2w"]), rs(K["e2b"]),
                rs(K["ln1w"]), rs(K["ln1b"])]
    return pl.pallas_call(
        functools.partial(_egnn_edge_kernel, m_dim=M_DIM),
        out_shape=jax.ShapeDtypeStruct((nk, Ep, M_DIM), jnp.float32),
        grid=(Ep // te, nk),                       # kernel axis innermost: cat_e read once
        in_specs=in_specs,
        out_specs=pl.BlockSpec((1, te, M_DIM), lambda i, k: (k, i, 0)),
        compiler_params=_cparams(("parallel", "arbitrary")),
    )(cat_e, K["e1w"], K["e1b"], K["e2w"], K["e2b"], K["ln1w"], K["ln1b"])


def egnn_node_update(K, x, m_agg, tn, Np):
    nk = K["e1w"].shape[0]
    f = KERNEL_DIM
    rs = lambda a: pl.BlockSpec((1,) + a.shape[1:], lambda i, k: (k, 0, 0))
    in_specs = [pl.BlockSpec((tn, f), lambda i, k: (i, 0)),          # x resident across k
                pl.BlockSpec((1, tn, f), lambda i, k: (k, i, 0)),    # aggregated messages
                rs(K["ln2w"]), rs(K["ln2b"]), rs(K["nn1w"]), rs(K["nn1b"]),
                rs(K["n1wx"]), rs(K["n1wm"]), rs(K["n1b"]),
                rs(K["n2w"]), rs(K["n2b"]), rs(K["nn2w"]), rs(K["nn2b"])]
    return pl.pallas_call(
        functools.partial(_egnn_node_kernel, f=f, m_dim=M_DIM),
        out_shape=jax.ShapeDtypeStruct((Np, nk * f), jnp.bfloat16),
        grid=(Np // tn, nk),
        in_specs=in_specs,
        out_specs=pl.BlockSpec((tn, f), lambda i, k: (i, k)),        # column-slice writes
        compiler_params=_cparams(("parallel", "arbitrary")),
    )(x, m_agg, K["ln2w"], K["ln2b"], K["nn1w"], K["nn1b"],
      K["n1wx"], K["n1wm"], K["n1b"], K["n2w"], K["n2b"], K["nn2w"], K["nn2b"])


# ------------------- GraphMultisetTransformer (1 head) -------------------

def gmt_forward(p, h, src_g, dst_s, dinfo, Np, tn):
    d = KERNEL_DIM
    nb, batch_pad, pos_pad, keymask, nbp, gpb, snp = dinfo
    scale = 1.0 / float(np.sqrt(d))
    sqp = p["qf_g"].shape[0]
    ns = p["num_seeds"]

    x1 = _row_call(functools.partial(_linear_kernel, act=None), [h],
                   [p["lin1"]["w"], p["lin1"]["b"]], d, tn, jnp.bfloat16)
    # GraphConv aggregation (aggr='add'); fused K/V projection (256-wide output).
    agg = _scatter_add(x1[src_g].astype(jnp.float32), dst_s, Np)
    gkv = _row_call(_graphconv_kernel, [agg, x1],
                    [p["gkv_rel_w"], p["gkv_rel_b"], p["gkv_root_w"]],
                    2 * d, tn, jnp.bfloat16)
    # to_dense_batch (padded once; out-of-range rows dropped)
    kvd = jnp.zeros((nbp, snp, 2 * d), jnp.bfloat16).at[batch_pad, pos_pad].set(
        gkv, mode="drop")

    mg = p["mab_g"]     # GMPool_G
    h1 = _mab_call(functools.partial(_mab_g_kernel, d=d, scale=scale),
                   [kvd, keymask],
                   [p["qf_g"], mg["fc_o"]["w"], mg["fc_o"]["b"],
                    mg["ln0"]["w"], mg["ln0"]["b"], mg["ln1"]["w"], mg["ln1"]["b"]],
                   (sqp, d), jnp.bfloat16, gpb)

    ms = p["mab_s"]     # SelfAtt
    h2 = _mab_call(functools.partial(_mab_self_kernel, d=d, sk=ns, scale=scale),
                   [h1],
                   [ms["fc_q"]["w"], ms["fc_q"]["b"], p["sab_kv_w"], p["sab_kv_b"],
                    ms["fc_o"]["w"], ms["fc_o"]["b"],
                    ms["ln0"]["w"], ms["ln0"]["b"], ms["ln1"]["w"], ms["ln1"]["b"]],
                   (sqp, d), jnp.bfloat16, gpb)

    mi = p["mab_i"]     # GMPool_I (+ lin2 fused)
    h3 = _mab_call(functools.partial(_mab_i_kernel, d=d, sk=ns, scale=scale),
                   [h2],
                   [p["qf_i"], p["i_kv_w"], p["i_kv_b"],
                    mi["fc_o"]["w"], mi["fc_o"]["b"],
                    mi["ln0"]["w"], mi["ln0"]["b"], mi["ln1"]["w"], mi["ln1"]["b"],
                    p["lin2"]["w"], p["lin2"]["b"]],
                   (1, d), jnp.float32, gpb)

    return h3[:nb, 0, :]


def post_pool_forward(pp, pooled):
    b, kdim = pooled.shape
    bp = _round_up(b, 8)
    xp = jnp.zeros((bp, kdim), jnp.float32).at[:b].set(pooled)
    n_mlp, rnn = pp["w1"].shape[0], pp["w1"].shape[-1]
    in_specs = [pl.BlockSpec((bp, kdim), lambda i: (0, 0))] + \
               [pl.BlockSpec((1,) + a.shape[1:], lambda i: (i, 0, 0))
                for a in (pp["w1"], pp["b1"], pp["w2"], pp["b2"], pp["w3"], pp["b3"])]
    out = pl.pallas_call(
        _post_pool_kernel,
        out_shape=jax.ShapeDtypeStruct((n_mlp, bp, rnn), jnp.float32),
        grid=(n_mlp,),
        in_specs=in_specs,
        out_specs=pl.BlockSpec((1, bp, rnn), lambda i: (i, 0, 0)),
        compiler_params=_cparams(("parallel",)),
    )(xp, pp["w1"], pp["b1"], pp["w2"], pp["b2"], pp["w3"], pp["b3"])
    return out[:, :b, :]


# ----------------------------- GraphTransformer -----------------------------

def graph_transformer_forward(P, g):
    atomids = g["atomids"]
    N = atomids.shape[0]
    src, dst = g["edge_index"][0], g["edge_index"][1]   # flow=source_to_target: (j, i)
    E = src.shape[0]
    tn = _pick_tile(N); Np = _round_up(N, tn)
    te = _pick_tile(E); Ep = _round_up(E, te)

    def pad1(a, n, fill=0):
        return jnp.full((n,), fill, a.dtype).at[:a.shape[0]].set(a)

    # pad node / edge index data ONCE; padded shapes flow through all row-grid calls
    ids = [pad1(g[k], Np) for k in ("atomids", "is_ring", "hyb", "arom")]
    src_g = pad1(src, Ep, 0)          # gather index for padded edges -> any valid node
    dst_g = pad1(dst, Ep, 0)
    dst_s = pad1(dst, Ep, Np)         # scatter index out of range -> dropped

    # embeddings + fused pre_egnn_mlp (Linear -> SiLU -> Linear)
    emb = jnp.concatenate([P["atom_emb"][ids[0]], P["ring_emb"][ids[1]],
                           P["hyb_emb"][ids[2]], P["arom_emb"][ids[3]]], axis=1)
    f = _row_call(functools.partial(_mlp2_kernel, act1="silu", act2=None),
                  [emb],
                  [P["pre_mlp"][0]["w"], P["pre_mlp"][0]["b"],
                   P["pre_mlp"][1]["w"], P["pre_mlp"][1]["b"]],
                  KERNEL_DIM, tn, jnp.bfloat16)

    # EGNN kernels: the reference forward never reassigns `features`, so all 3 kernels
    # consume the same pre-EGNN features; the edge inputs are gathered+concatenated once
    # and read from HBM once by the fused (row, kernel) grid.
    cat_e = jnp.concatenate([f[dst_g], f[src_g]], axis=-1)        # (Ep, 2f) bf16 = (x_i, x_j)
    m16 = egnn_edge_messages(P["egnn"], cat_e, te, Ep)            # (nk, Ep, 16) f32
    m_agg = jax.vmap(lambda mk: _scatter_add(mk, dst_s, Np))(m16) # aggr='add', 16 lanes
    m_agg = jnp.pad(m_agg, ((0, 0), (0, 0), (0, KERNEL_DIM - M_DIM)))
    feats = egnn_node_update(P["egnn"], f, m_agg, tn, Np)         # (Np, nk*128) bf16

    # fused post_egnn_mlp (3x Linear -> SiLU)
    h = _row_call(functools.partial(_mlp3_kernel, act_last=True), [feats],
                  [P["post_mlp"][0]["w"], P["post_mlp"][0]["b"],
                   P["post_mlp"][1]["w"], P["post_mlp"][1]["b"],
                   P["post_mlp"][2]["w"], P["post_mlp"][2]["b"]],
                  KERNEL_DIM, tn, jnp.bfloat16)

    # GMT dense-batch bookkeeping (computed once, shared by both pooling heads)
    nb, max_nodes, batch_idx, pos_idx, mask = g["dense_info"]
    gpb = _pick_gpb(nb)
    nbp = _round_up(nb, gpb)
    snp = _round_up(max_nodes, 8)
    batch_pad = pad1(batch_idx, Np, nbp)      # out-of-range graph idx -> dropped in scatter
    pos_pad = pad1(pos_idx, Np, 0)
    maskp = jnp.zeros((nbp, snp), bool).at[:nb, :max_nodes].set(mask)
    keymask = jnp.where(maskp, 0.0, -1e9).astype(jnp.float32)[:, None, :]
    dinfo = (nb, batch_pad, pos_pad, keymask, nbp, gpb, snp)

    pooled_parts = [gmt_forward(tp, h, src_g, dst_s, dinfo, Np, tn)
                    for tp in P["transformers"]]

    # molecular property branch (property_dim == 6)
    props = g["properties"]
    bp = _round_up(nb, 8)
    props_p = jnp.zeros((bp, 128), jnp.float32).at[:nb, :props.shape[1]].set(props)
    prop_feat = _row_call(functools.partial(_linear_kernel, act=None), [props_p],
                          [P["mol_prop"]["w"], P["mol_prop"]["b"]],
                          KERNEL_DIM, bp, jnp.float32)[:nb]

    pooled = jnp.concatenate(pooled_parts + [prop_feat], axis=1)  # (nb, (heads+1)*128)

    # two post-pooling MLPs, batched over a leading grid axis -> (2, B, rnn_dim)
    features = post_pool_forward(P["post_pool"], pooled)
    return features, jnp.zeros_like(features)


# ----------------------------- demo batch -----------------------------

def build_demo_batch(key, graph_sizes=(10, 8)):
    sizes = list(graph_sizes)
    num_graphs, n_total = len(sizes), sum(sizes)
    batch_np = np.concatenate([np.full(s, gi, np.int32) for gi, s in enumerate(sizes)])
    pos_np = np.concatenate([np.arange(s, dtype=np.int32) for s in sizes])
    max_nodes = max(sizes)
    mask_np = np.zeros((num_graphs, max_nodes), bool)
    mask_np[batch_np, pos_np] = True

    # bidirectional chain edges within each graph
    src, dst, off = [], [], 0
    for s in sizes:
        for k in range(s - 1):
            src += [off + k, off + k + 1]
            dst += [off + k + 1, off + k]
        off += s
    edge_index = jnp.asarray(np.stack([src, dst]).astype(np.int32))

    k1, k2, k3, k4, k5 = jax.random.split(key, 5)
    return {
        "atomids": jax.random.randint(k1, (n_total,), 0, 11),
        "is_ring": jax.random.randint(k2, (n_total,), 0, 2),
        "hyb": jax.random.randint(k3, (n_total,), 0, 4),
        "arom": jax.random.randint(k4, (n_total,), 0, 2),
        "properties": jax.random.normal(k5, (num_graphs, 6), jnp.float32),
        "edge_index": edge_index,
        "dense_info": (num_graphs, max_nodes,
                       jnp.asarray(batch_np), jnp.asarray(pos_np), jnp.asarray(mask_np)),
    }


if __name__ == "__main__":
    key = jax.random.PRNGKey(0)
    # Small constructor hyperparameters for the demo (kernel_dim / m_dim / emb_dim are fixed).
    params = init_graph_transformer(seed=0, n_kernels=3, rnn_dim=256,
                                    property_dim=6, pooling_heads=2)
    g = build_demo_batch(key)
    out, h0 = graph_transformer_forward(params, g)
    jax.block_until_ready(out)
    jax.block_until_ready(h0)
    assert out.shape == (2, 2, 256) and h0.shape == out.shape
    assert bool(jnp.all(jnp.isfinite(out)))
    print("KERNEL_OK")
</pallas_src>

<mosaic_0001>
module attributes {stable_mosaic.version = 11 : i64} {
  func.func @_mlp2_kernel(%arg0: i32, %arg1: memref<32x256xf32, #tpu.memory_space<vmem>>, %arg2: memref<256x256xbf16, #tpu.memory_space<vmem>>, %arg3: memref<1x256xf32, #tpu.memory_space<vmem>>, %arg4: memref<256x128xbf16, #tpu.memory_space<vmem>>, %arg5: memref<1x128xf32, #tpu.memory_space<vmem>>, %arg6: memref<32x128xbf16, #tpu.memory_space<vmem>>) attributes {dimension_semantics = [#tpu.dimension_semantics<parallel>], iteration_bounds = array<i64: 1>, scalar_prefetch = 0 : i64, scratch_operands = 0 : i64, tpu.core_type = #tpu.core_type<tc>, window_params = [{transform_indices = @transform_0, window_bounds = array<i64: 32, 256>}, {pipeline_mode = #tpu.pipeline_mode<synchronous>, transform_indices = @transform_1, window_bounds = array<i64: 256, 256>}, {pipeline_mode = #tpu.pipeline_mode<synchronous>, transform_indices = @transform_2, window_bounds = array<i64: 1, 256>}, {pipeline_mode = #tpu.pipeline_mode<synchronous>, transform_indices = @transform_3, window_bounds = array<i64: 256, 128>}, {pipeline_mode = #tpu.pipeline_mode<synchronous>, transform_indices = @transform_4, window_bounds = array<i64: 1, 128>}, {transform_indices = @transform_5, window_bounds = array<i64: 32, 128>}]} {
    %c0 = arith.constant 0 : index
    %c0_0 = arith.constant 0 : index
    %0 = vector.load %arg1[%c0, %c0_0] : memref<32x256xf32, #tpu.memory_space<vmem>>, vector<32x256xf32>
    %c0_1 = arith.constant 0 : index
    %c0_2 = arith.constant 0 : index
    %1 = vector.load %arg2[%c0_1, %c0_2] : memref<256x256xbf16, #tpu.memory_space<vmem>>, vector<256x256xbf16>
    %2 = arith.truncf %0 : vector<32x256xf32> to vector<32x256xbf16>
    %cst = arith.constant dense<0.000000e+00> : vector<32x256xf32>
    %3 = tpu.matmul %2, %1, %cst {dimension_numbers = #tpu.dot_dimension_numbers<[1], [0], [0], [1], [0, 0, 1, 1], [], []>} : vector<32x256xbf16>, vector<256x256xbf16>, vector<32x256xf32> -> vector<32x256xf32>
    %c0_3 = arith.constant 0 : index
    %c0_4 = arith.constant 0 : index
    %4 = vector.load %arg3[%c0_3, %c0_4] : memref<1x256xf32, #tpu.memory_space<vmem>>, vector<1x256xf32>
    %5 = vector.broadcast %4 : vector<1x256xf32> to vector<32x256xf32>
    %6 = arith.addf %3, %5 : vector<32x256xf32>
    %7 = arith.negf %6 : vector<32x256xf32>
    %8 = math.exp %7 : vector<32x256xf32>
    %cst_5 = arith.constant 1.000000e+00 : f32
    %9 = vector.broadcast %cst_5 : f32 to vector<32x256xf32>
    %10 = arith.addf %9, %8 : vector<32x256xf32>
    %11 = arith.divf %9, %10 : vector<32x256xf32>
    %12 = arith.mulf %6, %11 : vector<32x256xf32>
    %c0_6 = arith.constant 0 : index
    %c0_7 = arith.constant 0 : index
    %13 = vector.load %arg4[%c0_6, %c0_7] : memref<256x128xbf16, #tpu.memory_space<vmem>>, vector<256x128xbf16>
    %14 = arith.truncf %12 : vector<32x256xf32> to vector<32x256xbf16>
    %cst_8 = arith.constant dense<0.000000e+00> : vector<32x128xf32>
    %15 = tpu.matmul %14, %13, %cst_8 {dimension_numbers = #tpu.dot_dimension_numbers<[1], [0], [0], [1], [0, 0, 1, 1], [], []>} : vector<32x256xbf16>, vector<256x128xbf16>, vector<32x128xf32> -> vector<32x128xf32>
    %c0_9 = arith.constant 0 : index
    %c0_10 = arith.constant 0 : index
    %16 = vector.load %arg5[%c0_9, %c0_10] : memref<1x128xf32, #tpu.memory_space<vmem>>, vector<1x128xf32>
    %17 = vector.broadcast %16 : vector<1x128xf32> to vector<32x128xf32>
    %18 = arith.addf %15, %17 : vector<32x128xf32>
    %19 = arith.truncf %18 : vector<32x128xf32> to vector<32x128xbf16>
    %c0_11 = arith.constant 0 : index
    %c0_12 = arith.constant 0 : index
    %20 = vector.load %arg6[%c0_11, %c0_12] : memref<32x128xbf16, #tpu.memory_space<vmem>>, vector<32x128xbf16>
    tpu.vector_store %arg6[%c0_11, %c0_12], %19 {strides = array<i32>} : memref<32x128xbf16, #tpu.memory_space<vmem>>, vector<32x128xbf16>,
    return
  }
  func.func @transform_0(%arg0: i32) -> (i32, i32) {
    %c0_i32 = arith.constant 0 : i32
    %c0_i32_0 = arith.constant 0 : i32
    return %arg0, %c0_i32 : i32, i32
  }
  func.func @transform_1(%arg0: i32) -> (i32, i32) {
    %c0_i32 = arith.constant 0 : i32
    %c0_i32_0 = arith.constant 0 : i32
    %c0_i32_1 = arith.constant 0 : i32
    return %c0_i32, %c0_i32_0 : i32, i32
  }
  func.func @transform_2(%arg0: i32) -> (i32, i32) {
    %c0_i32 = arith.constant 0 : i32
    %c0_i32_0 = arith.constant 0 : i32
    %c0_i32_1 = arith.constant 0 : i32
    return %c0_i32, %c0_i32_0 : i32, i32
  }
  func.func @transform_3(%arg0: i32) -> (i32, i32) {
    %c0_i32 = arith.constant 0 : i32
    %c0_i32_0 = arith.constant 0 : i32
    %c0_i32_1 = arith.constant 0 : i32
    return %c0_i32, %c0_i32_0 : i32, i32
  }
  func.func @transform_4(%arg0: i32) -> (i32, i32) {
    %c0_i32 = arith.constant 0 : i32
    %c0_i32_0 = arith.constant 0 : i32
    %c0_i32_1 = arith.constant 0 : i32
    return %c0_i32, %c0_i32_0 : i32, i32
  }
  func.func @transform_5(%arg0: i32) -> (i32, i32) {
    %c0_i32 = arith.constant 0 : i32
    %c0_i32_0 = arith.constant 0 : i32
    return %arg0, %c0_i32 : i32, i32
  }
}

</mosaic_0001>

<llo_original>
// kernel: tpu_custom_call.1
$region0: #{tpu_custom_call.1}
  #allocation0 [shape = 'u32[]', space=smem, size = 0x4, offset = 0x4, fixed_abs, tag = 'smem constant byte address 0x4 - core index']
  #allocation1 [shape = 'u32[72,128]{1,0:T(1,128)}', space=vmem, size = 0x9000, scoped, tag = 'internal scratch']
  %s0 = inlined_call_operand.hbm [shape: f32[32,256], index: 0, kind: input, shape index: {}]
  %s1 = inlined_call_operand.hbm [shape: bf16[256,256], index: 1, kind: input, shape index: {}]
  %s2 = inlined_call_operand.hbm [shape: f32[1,256], index: 2, kind: input, shape index: {}]
  %s3 = inlined_call_operand.hbm [shape: bf16[256,128], index: 3, kind: input, shape index: {}]
  %s4 = inlined_call_operand.vmem [shape: f32[1,128], index: 4, kind: input, shape index: {}]
  %s5 = inlined_call_operand.hbm [shape: bf16[32,128], index: 5, kind: output, shape index: {}]
  %s6 = sld [smem:[#allocation0]]
  $region46: #{tpu_custom_call.1} parent=0
    _
  %s8 = ssub.s32 1, %s6
  %s9 = scalar_select 0, %s8, %s6
  $region1: #{tpu_custom_call.1} parent=0
    #allocation2 [shape = 'u8[32768]{0}', space=vmem, size = 0x8000, scoped, tag = 'input window, operand 0, single buffered']
    #allocation3 [shape = 's32[1]{0}', space=sflag, size = 0x4, scoped, tag = 'scoped memory for tpu_custom_call.1']
    #allocation4 [shape = 's32[1]{0}', space=sflag, size = 0x4, scoped, tag = 'scoped memory for tpu_custom_call.1']
    #allocation5 [shape = 'u8[131072]{0}', space=vmem, size = 0x20000, scoped, tag = 'input window, operand 1, single buffered']
    #allocation6 [shape = 's32[1]{0}', space=sflag, size = 0x4, scoped, tag = 'scoped memory for tpu_custom_call.1']
    #allocation7 [shape = 'u8[1024]{0}', space=vmem, size = 0x400, scoped, tag = 'input window, operand 2, single buffered']
    #allocation8 [shape = 'u8[65536]{0}', space=vmem, size = 0x10000, scoped, tag = 'input window, operand 3, single buffered']
    #allocation9 [shape = 's32[1]{0}', space=sflag, size = 0x4, scoped, tag = 'scoped memory for tpu_custom_call.1']
    #allocation10 [shape = 'u8[8192]{0}', space=vmem, size = 0x2000, scoped, tag = 'output window, operand 0, single buffered']
    %10 = vsyncpa [#allocation3], 0
    %11 = vsyncpa [#allocation6], 0
    %12 = vsyncpa [#allocation9], 0
    %13 = vsyncpa [#allocation4], 0
    // Predicated region
    $region2: #{tpu_custom_call.1} parent=1 // pred_check
      _
    $region3: #{tpu_custom_call.1} parent=1 // pred_check_branch
      %15 = sbr.rel (0) target = $region5
    $region4: #{tpu_custom_call.1} parent=1 // pred_region
      %17 = vsyncadd [#allocation3], 0
      %s18 = sshll.u32 %s0, 4
      %s19 = int_to_ptr.hbm [resolvable:$true] %s18
      %s20 = sshll.u32 [#allocation2], 4
      %s21 = int_to_ptr.vmem [resolvable:$true] %s20
      %26 = dma.hbm_to_vmem [thread:$0]  %s19, 1024, %s21, [#allocation3], 256, 256, 16
    $region5: #{tpu_custom_call.1} parent=1 // pred_fallthru
      _
    // Predicated region
    $region6: #{tpu_custom_call.1} parent=1 // pred_check
      _
    $region7: #{tpu_custom_call.1} parent=1 // pred_check_branch
      %28 = sbr.rel (0) target = $region9
    $region8: #{tpu_custom_call.1} parent=1 // pred_region
      %30 = vsyncadd [#allocation6], 0
      %s31 = sshll.u32 %s1, 4
      %s32 = int_to_ptr.hbm [resolvable:$true] %s31
      %s33 = sshll.u32 [#allocation5], 4
      %s34 = int_to_ptr.vmem [resolvable:$true] %s33
      %39 = dma.hbm_to_vmem [thread:$0]  %s32, 4096, %s34, [#allocation6], 128, 128, 8
    $region9: #{tpu_custom_call.1} parent=1 // pred_fallthru
      _
    // Predicated region
    $region10: #{tpu_custom_call.1} parent=1 // pred_check
      _
    $region11: #{tpu_custom_call.1} parent=1 // pred_check_branch
      %41 = sbr.rel (0) target = $region13
    $region12: #{tpu_custom_call.1} parent=1 // pred_region
      %43 = vsyncadd [#allocation6], 0
      %s45 = sshll.u32 %s2, 4
      %s46 = int_to_ptr.hbm [resolvable:$true] %s45
      %s47 = sshll.u32 [#allocation7], 4
      %s48 = int_to_ptr.vmem [resolvable:$true] %s47
      %50 = dma.hbm_to_vmem [thread:$0]  %s46, 32, %s48, [#allocation6]
    $region13: #{tpu_custom_call.1} parent=1 // pred_fallthru
      _
    // Predicated region
    $region14: #{tpu_custom_call.1} parent=1 // pred_check
      _
    $region15: #{tpu_custom_call.1} parent=1 // pred_check_branch
      %52 = sbr.rel (0) target = $region17
    $region16: #{tpu_custom_call.1} parent=1 // pred_region
      %54 = vsyncadd [#allocation9], 0
      %s55 = sshll.u32 %s3, 4
      %s56 = int_to_ptr.hbm [resolvable:$true] %s55
      %s57 = sshll.u32 [#allocation8], 4
      %s58 = int_to_ptr.vmem [resolvable:$true] %s57
      %63 = dma.hbm_to_vmem [thread:$0]  %s56, 2048, %s58, [#allocation9], 64, 64, 4
    $region17: #{tpu_custom_call.1} parent=1 // pred_fallthru
      _
    // Predicated region
    $region18: #{tpu_custom_call.1} parent=1 // pred_check
      _
    $region19: #{tpu_custom_call.1} parent=1 // pred_check_branch
      %65 = sbr.rel (0) target = $region21
    $region20: #{tpu_custom_call.1} parent=1 // pred_region
      _
    $region21: #{tpu_custom_call.1} parent=1 // pred_fallthru
      _
    // Predicated region
    $region22: #{tpu_custom_call.1} parent=1 // pred_check
      _
    $region23: #{tpu_custom_call.1} parent=1 // pred_check_branch
      %67 = sbr.rel (0) target = $region25
    $region24: #{tpu_custom_call.1} parent=1 // pred_region
      %69 = dma.done [#allocation3], 1024
    $region25: #{tpu_custom_call.1} parent=1 // pred_fallthru
      _
    // Predicated region
    $region26: #{tpu_custom_call.1} parent=1 // pred_check
      _
    $region27: #{tpu_custom_call.1} parent=1 // pred_check_branch
      %71 = sbr.rel (0) target = $region29
    $region28: #{tpu_custom_call.1} parent=1 // pred_region
      %73 = dma.done [#allocation6], 4096
    $region29: #{tpu_custom_call.1} parent=1 // pred_fallthru
      _
    // Predicated region
    $region30: #{tpu_custom_call.1} parent=1 // pred_check
      _
    $region31: #{tpu_custom_call.1} parent=1 // pred_check_branch
      %75 = sbr.rel (0) target = $region33
    $region32: #{tpu_custom_call.1} parent=1 // pred_region
      %77 = dma.done [#allocation6], 32
    $region33: #{tpu_custom_call.1} parent=1 // pred_fallthru
      _
    // Predicated region
    $region34: #{tpu_custom_call.1} parent=1 // pred_check
      _
    $region35: #{tpu_custom_call.1} parent=1 // pred_check_branch
      %79 = sbr.rel (0) target = $region37
    $region36: #{tpu_custom_call.1} parent=1 // pred_region
      %81 = dma.done [#allocation9], 2048
    $region37: #{tpu_custom_call.1} parent=1 // pred_fallthru
      _
    %v82 = vld [vmem:[#allocation2] sm:$0xff]
    %v83 = vld [vmem:[#allocation2 + $0x8] sm:$0xff]
    %v84 = vld [vmem:[#allocation2 + $0x10] sm:$0xff]
    %v85 = vld [vmem:[#allocation2 + $0x18] sm:$0xff]
    %v86 = vld [vmem:[#allocation2 + $0x20] sm:$0xff]
    %v87 = vld [vmem:[#allocation2 + $0x28] sm:$0xff]
    %v88 = vld [vmem:[#allocation2 + $0x30] sm:$0xff]
    %v89 = vld [vmem:[#allocation2 + $0x38] sm:$0xff]
    %v90 = vld [vmem:[#allocation5] sm:$0xff]
    %v91 = vld [vmem:[#allocation5 + $0x8] sm:$0xff]
    %v92 = vld [vmem:[#allocation5 + $0x10] sm:$0xff]
    %v93 = vld [vmem:[#allocation5 + $0x18] sm:$0xff]
    %v94 = vld [vmem:[#allocation5 + $0x20] sm:$0xff]
    %v95 = vld [vmem:[#allocation5 + $0x28] sm:$0xff]
    %v96 = vld [vmem:[#allocation5 + $0x30] sm:$0xff]
    %v97 = vld [vmem:[#allocation5 + $0x38] sm:$0xff]
    %v98 = vld [vmem:[#allocation5 + $0x40] sm:$0xff]
    %v99 = vld [vmem:[#allocation5 + $0x48] sm:$0xff]
    %v100 = vld [vmem:[#allocation5 + $0x50] sm:$0xff]
    %v101 = vld [vmem:[#allocation5 + $0x58] sm:$0xff]
    %v102 = vld [vmem:[#allocation5 + $0x60] sm:$0xff]
    %v103 = vld [vmem:[#allocation5 + $0x68] sm:$0xff]
    %v104 = vld [vmem:[#allocation5 + $0x70] sm:$0xff]
    %v105 = vld [vmem:[#allocation5 + $0x78] sm:$0xff]
    %v106 = vld [vmem:[#allocation5 + $0x80] sm:$0xff]
    %v107 = vld [vmem:[#allocation5 + $0x88] sm:$0xff]
    %v108 = vld [vmem:[#allocation5 + $0x90] sm:$0xff]
    %v109 = vld [vmem:[#allocation5 + $0x98] sm:$0xff]
    %v110 = vld [vmem:[#allocation5 + $0xa0] sm:$0xff]
    %v111 = vld [vmem:[#allocation5 + $0xa8] sm:$0xff]
    %v112 = vld [vmem:[#allocation5 + $0xb0] sm:$0xff]
    %v113 = vld [vmem:[#allocation5 + $0xb8] sm:$0xff]
    %v114 = vld [vmem:[#allocation5 + $0xc0] sm:$0xff]
    %v115 = vld [vmem:[#allocation5 + $0xc8] sm:$0xff]
    %v116 = vld [vmem:[#allocation5 + $0xd0] sm:$0xff]
    %v117 = vld [vmem:[#allocation5 + $0xd8] sm:$0xff]
    %v118 = vld [vmem:[#allocation5 + $0xe0] sm:$0xff]
    %v119 = vld [vmem:[#allocation5 + $0xe8] sm:$0xff]
    %v120 = vld [vmem:[#allocation5 + $0xf0] sm:$0xff]
    %v121 = vld [vmem:[#allocation5 + $0xf8] sm:$0xff]
    %v122 = vpack.c.bf16 %v84, %v82
    %v123 = vpack.c.bf16 %v85, %v83
    %v124 = vpack.c.bf16 %v88, %v86
    %v125 = vpack.c.bf16 %v89, %v87
    %v126 = vld [vmem:[#allocation7] sm:$0x3]
    %v128 = vperm.slane %v126, 0
    %v129 = vperm.slane %v126, 1
    %v164 = vunpack.c.l.b16 %v90
    %v165 = vunpack.c.h.b16 %v90
    %v166 = vunpack.c.l.b16 %v91
    %v167 = vunpack.c.h.b16 %v91
    %v168 = vunpack.c.l.b16 %v92
    %v169 = vunpack.c.h.b16 %v92
    %v170 = vunpack.c.l.b16 %v93
    %v171 = vunpack.c.h.b16 %v93
    %v172 = vunpack.c.l.b16 %v94
    %v173 = vunpack.c.h.b16 %v94
    %v174 = vunpack.c.l.b16 %v95
    %v175 = vunpack.c.h.b16 %v95
    %v176 = vunpack.c.l.b16 %v96
    %v177 = vunpack.c.h.b16 %v96
    %v178 = vunpack.c.l.b16 %v97
    %v179 = vunpack.c.h.b16 %v97
    %v180 = vunpack.c.l.b16 %v98
    %v181 = vunpack.c.h.b16 %v98
    %v182 = vunpack.c.l.b16 %v99
    %v183 = vunpack.c.h.b16 %v99
    %v184 = vunpack.c.l.b16 %v100
    %v185 = vunpack.c.h.b16 %v100
    %v186 = vunpack.c.l.b16 %v101
    %v187 = vunpack.c.h.b16 %v101
    %v188 = vunpack.c.l.b16 %v102
    %v189 = vunpack.c.h.b16 %v102
    %v190 = vunpack.c.l.b16 %v103
    %v191 = vunpack.c.h.b16 %v103
    %v192 = vunpack.c.l.b16 %v104
    %v193 = vunpack.c.h.b16 %v104
    %v194 = vunpack.c.l.b16 %v105
    %v195 = vunpack.c.h.b16 %v105
    %v196 = vunpack.c.l.b16 %v106
    %v197 = vunpack.c.h.b16 %v106
    %v198 = vunpack.c.l.b16 %v107
    %v199 = vunpack.c.h.b16 %v107
    %v200 = vunpack.c.l.b16 %v108
    %v201 = vunpack.c.h.b16 %v108
    %v202 = vunpack.c.l.b16 %v109
    %v203 = vunpack.c.h.b16 %v109
    %v204 = vunpack.c.l.b16 %v110
    %v205 = vunpack.c.h.b16 %v110
    %v206 = vunpack.c.l.b16 %v111
    %v207 = vunpack.c.h.b16 %v111
    %v208 = vunpack.c.l.b16 %v112
    %v209 = vunpack.c.h.b16 %v112
    %v210 = vunpack.c.l.b16 %v113
    %v211 = vunpack.c.h.b16 %v113
    %v212 = vunpack.c.l.b16 %v114
    %v213 = vunpack.c.h.b16 %v114
    %v214 = vunpack.c.l.b16 %v115
    %v215 = vunpack.c.h.b16 %v115
    %v216 = vunpack.c.l.b16 %v116
    %v217 = vunpack.c.h.b16 %v116
    %v218 = vunpack.c.l.b16 %v117
    %v219 = vunpack.c.h.b16 %v117
    %v220 = vunpack.c.l.b16 %v118
    %v221 = vunpack.c.h.b16 %v118
    %v222 = vunpack.c.l.b16 %v119
    %v223 = vunpack.c.h.b16 %v119
    %v224 = vunpack.c.l.b16 %v120
    %v225 = vunpack.c.h.b16 %v120
    %v226 = vunpack.c.l.b16 %v121
    %v227 = vunpack.c.h.b16 %v121
    %v228 = vpack.c.b16 %v166, %v164
    %v229 = vpack.c.b16 %v167, %v165
    %v230 = vpack.c.b16 %v170, %v168
    %v231 = vpack.c.b16 %v171, %v169
    %v232 = vpack.c.b16 %v174, %v172
    %v233 = vpack.c.b16 %v175, %v173
    %v234 = vpack.c.b16 %v178, %v176
    %v235 = vpack.c.b16 %v179, %v177
    %v236 = vpack.c.b16 %v182, %v180
    %v237 = vpack.c.b16 %v183, %v181
    %v238 = vpack.c.b16 %v186, %v184
    %v239 = vpack.c.b16 %v187, %v185
    %v240 = vpack.c.b16 %v190, %v188
    %v241 = vpack.c.b16 %v191, %v189
    %v242 = vpack.c.b16 %v194, %v192
    %v243 = vpack.c.b16 %v195, %v193
    %v244 = vpack.c.b16 %v198, %v196
    %v245 = vpack.c.b16 %v199, %v197
    %v246 = vpack.c.b16 %v202, %v200
    %v247 = vpack.c.b16 %v203, %v201
    %v248 = vpack.c.b16 %v206, %v204
    %v249 = vpack.c.b16 %v207, %v205
    %v250 = vpack.c.b16 %v210, %v208
    %v251 = vpack.c.b16 %v211, %v209
    %v252 = vpack.c.b16 %v214, %v212
    %v253 = vpack.c.b16 %v215, %v213
    %v254 = vpack.c.b16 %v218, %v216
    %v255 = vpack.c.b16 %v219, %v217
    %v256 = vpack.c.b16 %v222, %v220
    %v257 = vpack.c.b16 %v223, %v221
    %v258 = vpack.c.b16 %v226, %v224
    %v259 = vpack.c.b16 %v227, %v225
    %292 = vmatpush.bf16.msra.mxu0 %v242
    %293 = vmatpush.bf16.msra.mxu0 %v240
    %294 = vmatpush.bf16.msra.mxu0 %v238
    %295 = vmatpush.bf16.msra.mxu0 %v236
    %296 = vmatpush.bf16.msra.mxu0 %v234
    %297 = vmatpush.bf16.msra.mxu0 %v232
    %298 = vmatpush.bf16.msra.mxu0 %v230
    %299 = vmatpush.bf16.msra.mxu0 %v228
    %300 = vmatmul.bf16.gmra.mxu0 %v122
    %v301 = vpop.f32.mrf.mxu0
    %v302 = vadd.f32 %v128, %v301
    %v303 = vpop.f32.mrf.mxu0
    %v304 = vadd.f32 %v128, %v303
    %305 = vmatmul.bf16.gmra.mxu0 %v124
    %v306 = vpop.f32.mrf.mxu0
    %v307 = vadd.f32 %v128, %v306
    %v308 = vpop.f32.mrf.mxu0
    %v309 = vadd.f32 %v128, %v308
    %310 = vdwg.mxu0
    %311 = vmatpush.bf16.msra.mxu0 %v258
    %312 = vmatpush.bf16.msra.mxu0 %v256
    %313 = vmatpush.bf16.msra.mxu0 %v254
    %314 = vmatpush.bf16.msra.mxu0 %v252
    %315 = vmatpush.bf16.msra.mxu0 %v250
    %316 = vmatpush.bf16.msra.mxu0 %v248
    %317 = vmatpush.bf16.msra.mxu0 %v246
    %318 = vmatpush.bf16.msra.mxu0 %v244
    %319 = vmatmul.bf16.gmra.mxu0 %v123
    %v320 = vpop.f32.mrf.mxu0
    %v321 = vadd.f32 %v302, %v320
    %v322 = vpop.f32.mrf.mxu0
    %v323 = vadd.f32 %v304, %v322
    %324 = vmatmul.bf16.gmra.mxu0 %v125
    %v325 = vpop.f32.mrf.mxu0
    %v326 = vadd.f32 %v307, %v325
    %v327 = vpop.f32.mrf.mxu0
    %v328 = vadd.f32 %v309, %v327
    %329 = vdwg.mxu0
    %330 = vmatpush.bf16.msra.mxu0 %v243
    %331 = vmatpush.bf16.msra.mxu0 %v241
    %332 = vmatpush.bf16.msra.mxu0 %v239
    %333 = vmatpush.bf16.msra.mxu0 %v237
    %334 = vmatpush.bf16.msra.mxu0 %v235
    %335 = vmatpush.bf16.msra.mxu0 %v233
    %336 = vmatpush.bf16.msra.mxu0 %v231
    %337 = vmatpush.bf16.msra.mxu0 %v229
    %338 = vmatmul.bf16.gmra.mxu0 %v122
    %v339 = vpop.f32.mrf.mxu0
    %v340 = vadd.f32 %v129, %v339
    %v341 = vpop.f32.mrf.mxu0
    %v342 = vadd.f32 %v129, %v341
    %343 = vmatmul.bf16.gmra.mxu0 %v124
    %v344 = vpop.f32.mrf.mxu0
    %v345 = vadd.f32 %v129, %v344
    %v346 = vpop.f32.mrf.mxu0
    %v347 = vadd.f32 %v129, %v346
    %348 = vdwg.mxu0
    %349 = vmatpush.bf16.msra.mxu0 %v259
    %350 = vmatpush.bf16.msra.mxu0 %v257
    %351 = vmatpush.bf16.msra.mxu0 %v255
    %352 = vmatpush.bf16.msra.mxu0 %v253
    %353 = vmatpush.bf16.msra.mxu0 %v251
    %354 = vmatpush.bf16.msra.mxu0 %v249
    %355 = vmatpush.bf16.msra.mxu0 %v247
    %356 = vmatpush.bf16.msra.mxu0 %v245
    %357 = vmatmul.bf16.gmra.mxu0 %v123
    %v358 = vpop.f32.mrf.mxu0
    %v359 = vadd.f32 %v340, %v358
    %v360 = vpop.f32.mrf.mxu0
    %v361 = vadd.f32 %v342, %v360
    %362 = vmatmul.bf16.gmra.mxu0 %v125
    %v363 = vpop.f32.mrf.mxu0
    %v364 = vadd.f32 %v345, %v363
    %v365 = vpop.f32.mrf.mxu0
    %v366 = vadd.f32 %v347, %v365
    %367 = vdwg.mxu0
    %v368 = vxor.u32 %v321, 2147483648
    %v369 = vxor.u32 %v359, 2147483648
    %v370 = vxor.u32 %v323, 2147483648
    %v371 = vxor.u32 %v361, 2147483648
    %v372 = vxor.u32 %v326, 2147483648
    %v373 = vxor.u32 %v364, 2147483648
    %v374 = vxor.u32 %v328, 2147483648
    %v375 = vxor.u32 %v366, 2147483648
    %v376 = vmul.f32 %v368, 1.442695
    %v377 = vpow.pop %v376
    %v378 = vmul.f32 %v369, 1.442695
    %v379 = vpow.pop %v378
    %v380 = vmul.f32 %v370, 1.442695
    %v381 = vpow.pop %v380
    %v382 = vmul.f32 %v371, 1.442695
    %v383 = vpow.pop %v382
    %v384 = vmul.f32 %v372, 1.442695
    %v385 = vpow.pop %v384
    %v386 = vmul.f32 %v373, 1.442695
    %v387 = vpow.pop %v386
    %v388 = vmul.f32 %v374, 1.442695
    %v389 = vpow.pop %v388
    %v390 = vmul.f32 %v375, 1.442695
    %v391 = vpow.pop %v390
    %v392 = vadd.f32 %v377, 1.0
    %v393 = vadd.f32 %v379, 1.0
    %v394 = vadd.f32 %v381, 1.0
    %v395 = vadd.f32 %v383, 1.0
    %v396 = vadd.f32 %v385, 1.0
    %v397 = vadd.f32 %v387, 1.0
    %v398 = vadd.f32 %v389, 1.0
    %v399 = vadd.f32 %v391, 1.0
    %v400 = vrcp.pop %v392
    %v401 = vmul.f32 %v392, %v400
    %v402 = vsub.f32 1.0, %v401
    %v403 = vmul.f32 %v400, %v402
    %v404 = vadd.f32 %v400, %v403
    %vm405 = vweird.f32 %v392
    %vm406 = vweird.f32 %v400
    %vm407 = vmor %vm405, %vm406
    %v408 = vsel %vm407, %v400, %v404
    %v409 = vand.u32 2147483647, %v392
    %vm410 = vcmp.eq.f32.partialorder %v409, 8.507059e+37
    %v411 = vand.u32 %v392, 2147483648
    %v412 = vor.u32 1.1754944e-38, %v411
    %v413 = vsel %vm410, %v412, %v408
    %v414 = vmul.f32 1.0, %v413
    %v415 = vrcp.pop %v393
    %v416 = vmul.f32 %v393, %v415
    %v417 = vsub.f32 1.0, %v416
    %v418 = vmul.f32 %v415, %v417
    %v419 = vadd.f32 %v415, %v418
    %vm420 = vweird.f32 %v393
    %vm421 = vweird.f32 %v415
    %vm422 = vmor %vm420, %vm421
    %v423 = vsel %vm422, %v415, %v419
    %v424 = vand.u32 2147483647, %v393
    %vm425 = vcmp.eq.f32.partialorder %v424, 8.507059e+37
    %v426 = vand.u32 %v393, 2147483648
    %v427 = vor.u32 1.1754944e-38, %v426
    %v428 = vsel %vm425, %v427, %v423
    %v429 = vmul.f32 1.0, %v428
    %v430 = vrcp.pop %v394
    %v431 = vmul.f32 %v394, %v430
    %v432 = vsub.f32 1.0, %v431
    %v433 = vmul.f32 %v430, %v432
    %v434 = vadd.f32 %v430, %v433
    %vm435 = vweird.f32 %v394
    %vm436 = vweird.f32 %v430
    %vm437 = vmor %vm435, %vm436
    %v438 = vsel %vm437, %v430, %v434
    %v439 = vand.u32 2147483647, %v394
    %vm440 = vcmp.eq.f32.partialorder %v439, 8.507059e+37
    %v441 = vand.u32 %v394, 2147483648
    %v442 = vor.u32 1.1754944e-38, %v441
    %v443 = vsel %vm440, %v442, %v438
    %v444 = vmul.f32 1.0, %v443
    %v445 = vrcp.pop %v395
    %v446 = vmul.f32 %v395, %v445
    %v447 = vsub.f32 1.0, %v446
    %v448 = vmul.f32 %v445, %v447
    %v449 = vadd.f32 %v445, %v448
    %vm450 = vweird.f32 %v395
    %vm451 = vweird.f32 %v445
    %vm452 = vmor %vm450, %vm451
    %v453 = vsel %vm452, %v445, %v449
    %v454 = vand.u32 2147483647, %v395
    %vm455 = vcmp.eq.f32.partialorder %v454, 8.507059e+37
    %v456 = vand.u32 %v395, 2147483648
    %v457 = vor.u32 1.1754944e-38, %v456
    %v458 = vsel %vm455, %v457, %v453
    %v459 = vmul.f32 1.0, %v458
    %v460 = vrcp.pop %v396
    %v461 = vmul.f32 %v396, %v460
    %v462 = vsub.f32 1.0, %v461
    %v463 = vmul.f32 %v460, %v462
    %v464 = vadd.f32 %v460, %v463
    %vm465 = vweird.f32 %v396
    %vm466 = vweird.f32 %v460
    %vm467 = vmor %vm465, %vm466
    %v468 = vsel %vm467, %v460, %v464
    %v469 = vand.u32 2147483647, %v396
    %vm470 = vcmp.eq.f32.partialorder %v469, 8.507059e+37
    %v471 = vand.u32 %v396, 2147483648
    %v472 = vor.u32 1.1754944e-38, %v471
    %v473 = vsel %vm470, %v472, %v468
    %v474 = vmul.f32 1.0, %v473
    %v475 = vrcp.pop %v397
    %v476 = vmul.f32 %v397, %v475
    %v477 = vsub.f32 1.0, %v476
    %v478 = vmul.f32 %v475, %v477
    %v479 = vadd.f32 %v475, %v478
    %vm480 = vweird.f32 %v397
    %vm481 = vweird.f32 %v475
    %vm482 = vmor %vm480, %vm481
    %v483 = vsel %vm482, %v475, %v479
    %v484 = vand.u32 2147483647, %v397
    %vm485 = vcmp.eq.f32.partialorder %v484, 8.507059e+37
    %v486 = vand.u32 %v397, 2147483648
    %v487 = vor.u32 1.1754944e-38, %v486
    %v488 = vsel %vm485, %v487, %v483
    %v489 = vmul.f32 1.0, %v488
    %v490 = vrcp.pop %v398
    %v491 = vmul.f32 %v398, %v490
    %v492 = vsub.f32 1.0, %v491
    %v493 = vmul.f32 %v490, %v492
    %v494 = vadd.f32 %v490, %v493
    %vm495 = vweird.f32 %v398
    %vm496 = vweird.f32 %v490
    %vm497 = vmor %vm495, %vm496
    %v498 = vsel %vm497, %v490, %v494
    %v499 = vand.u32 2147483647, %v398
    %vm500 = vcmp.eq.f32.partialorder %v499, 8.507059e+37
    %v501 = vand.u32 %v398, 2147483648
    %v502 = vor.u32 1.1754944e-38, %v501
    %v503 = vsel %vm500, %v502, %v498
    %v504 = vmul.f32 1.0, %v503
    %v505 = vrcp.pop %v399
    %v506 = vmul.f32 %v399, %v505
    %v507 = vsub.f32 1.0, %v506
    %v508 = vmul.f32 %v505, %v507
    %v509 = vadd.f32 %v505, %v508
    %vm510 = vweird.f32 %v399
    %vm511 = vweird.f32 %v505
    %vm512 = vmor %vm510, %vm511
    %v513 = vsel %vm512, %v505, %v509
    %v514 = vand.u32 2147483647, %v399
    %vm515 = vcmp.eq.f32.partialorder %v514, 8.507059e+37
    %v516 = vand.u32 %v399, 2147483648
    %v517 = vor.u32 1.1754944e-38, %v516
    %v518 = vsel %vm515, %v517, %v513
    %v519 = vmul.f32 1.0, %v518
    %v520 = vmul.f32 %v321, %v414
    %v521 = vmul.f32 %v359, %v429
    %v522 = vmul.f32 %v323, %v444
    %v523 = vmul.f32 %v361, %v459
    %v524 = vmul.f32 %v326, %v474
    %v525 = vmul.f32 %v364, %v489
    %v526 = vmul.f32 %v328, %v504
    %v527 = vmul.f32 %v366, %v519
    %v528 = vld [vmem:[#allocation8] sm:$0xf]
    %v529 = vld [vmem:[#allocation8 + $0x4] sm:$0xf]
    %v530 = vld [vmem:[#allocation8 + $0x8] sm:$0xf]
    %v531 = vld [vmem:[#allocation8 + $0xc] sm:$0xf]
    %v532 = vld [vmem:[#allocation8 + $0x10] sm:$0xf]
    %v533 = vld [vmem:[#allocation8 + $0x14] sm:$0xf]
    %v534 = vld [vmem:[#allocation8 + $0x18] sm:$0xf]
    %v535 = vld [vmem:[#allocation8 + $0x1c] sm:$0xf]
    %v536 = vld [vmem:[#allocation8 + $0x20] sm:$0xf]
    %v537 = vld [vmem:[#allocation8 + $0x24] sm:$0xf]
    %v538 = vld [vmem:[#allocation8 + $0x28] sm:$0xf]
    %v539 = vld [vmem:[#allocation8 + $0x2c] sm:$0xf]
    %v540 = vld [vmem:[#allocation8 + $0x30] sm:$0xf]
    %v541 = vld [vmem:[#allocation8 + $0x34] sm:$0xf]
    %v542 = vld [vmem:[#allocation8 + $0x38] sm:$0xf]
    %v543 = vld [vmem:[#allocation8 + $0x3c] sm:$0xf]
    %v544 = vld [vmem:[#allocation8 + $0x40] sm:$0xf]
    %v545 = vld [vmem:[#allocation8 + $0x44] sm:$0xf]
    %v546 = vld [vmem:[#allocation8 + $0x48] sm:$0xf]
    %v547 = vld [vmem:[#allocation8 + $0x4c] sm:$0xf]
    %v548 = vld [vmem:[#allocation8 + $0x50] sm:$0xf]
    %v549 = vld [vmem:[#allocation8 + $0x54] sm:$0xf]
    %v550 = vld [vmem:[#allocation8 + $0x58] sm:$0xf]
    %v551 = vld [vmem:[#allocation8 + $0x5c] sm:$0xf]
    %v552 = vld [vmem:[#allocation8 + $0x60] sm:$0xf]
    %v553 = vld [vmem:[#allocation8 + $0x64] sm:$0xf]
    %v554 = vld [vmem:[#allocation8 + $0x68] sm:$0xf]
    %v555 = vld [vmem:[#allocation8 + $0x6c] sm:$0xf]
    %v556 = vld [vmem:[#allocation8 + $0x70] sm:$0xf]
    %v557 = vld [vmem:[#allocation8 + $0x74] sm:$0xf]
    %v558 = vld [vmem:[#allocation8 + $0x78] sm:$0xf]
    %v559 = vld [vmem:[#allocation8 + $0x7c] sm:$0xf]
    %v560 = vpack.c.bf16 %v522, %v520
    %v561 = vpack.c.bf16 %v523, %v521
    %v562 = vpack.c.bf16 %v526, %v524
    %v563 = vpack.c.bf16 %v527, %v525
    %v564 = vld [vmem:[%s4] sm:$0x1]
    %v566 = vperm.slane %v564, 0
    %v600 = vunpack.c.l.b16 %v528
    %v601 = vunpack.c.l.b16 %v529
    %v602 = vunpack.c.l.b16 %v530
    %v603 = vunpack.c.l.b16 %v531
    %v604 = vunpack.c.l.b16 %v532
    %v605 = vunpack.c.l.b16 %v533
    %v606 = vunpack.c.l.b16 %v534
    %v607 = vunpack.c.l.b16 %v535
    %v608 = vunpack.c.l.b16 %v536
    %v609 = vunpack.c.l.b16 %v537
    %v610 = vunpack.c.l.b16 %v538
    %v611 = vunpack.c.l.b16 %v539
    %v612 = vunpack.c.l.b16 %v540
    %v613 = vunpack.c.l.b16 %v541
    %v614 = vunpack.c.l.b16 %v542
    %v615 = vunpack.c.l.b16 %v543
    %v616 = vunpack.c.l.b16 %v544
    %v617 = vunpack.c.l.b16 %v545
    %v618 = vunpack.c.l.b16 %v546
    %v619 = vunpack.c.l.b16 %v547
    %v620 = vunpack.c.l.b16 %v548
    %v621 = vunpack.c.l.b16 %v549
    %v622 = vunpack.c.l.b16 %v550
    %v623 = vunpack.c.l.b16 %v551
    %v624 = vunpack.c.l.b16 %v552
    %v625 = vunpack.c.l.b16 %v553
    %v626 = vunpack.c.l.b16 %v554
    %v627 = vunpack.c.l.b16 %v555
    %v628 = vunpack.c.l.b16 %v556
    %v629 = vunpack.c.l.b16 %v557
    %v630 = vunpack.c.l.b16 %v558
    %v631 = vunpack.c.l.b16 %v559
    %v632 = vpack.c.b16 %v601, %v600
    %v633 = vpack.c.b16 %v603, %v602
    %v634 = vpack.c.b16 %v605, %v604
    %v635 = vpack.c.b16 %v607, %v606
    %v636 = vpack.c.b16 %v609, %v608
    %v637 = vpack.c.b16 %v611, %v610
    %v638 = vpack.c.b16 %v613, %v612
    %v639 = vpack.c.b16 %v615, %v614
    %v640 = vpack.c.b16 %v617, %v616
    %v641 = vpack.c.b16 %v619, %v618
    %v642 = vpack.c.b16 %v621, %v620
    %v643 = vpack.c.b16 %v623, %v622
    %v644 = vpack.c.b16 %v625, %v624
    %v645 = vpack.c.b16 %v627, %v626
    %v646 = vpack.c.b16 %v629, %v628
    %v647 = vpack.c.b16 %v631, %v630
    %664 = vmatpush.bf16.msra.mxu0 %v639
    %665 = vmatpush.bf16.msra.mxu0 %v638
    %666 = vmatpush.bf16.msra.mxu0 %v637
    %667 = vmatpush.bf16.msra.mxu0 %v636
    %668 = vmatpush.bf16.msra.mxu0 %v635
    %669 = vmatpush.bf16.msra.mxu0 %v634
    %670 = vmatpush.bf16.msra.mxu0 %v633
    %671 = vmatpush.bf16.msra.mxu0 %v632
    %672 = vmatmul.bf16.gmra.mxu0 %v560
    %v673 = vpop.f32.mrf.mxu0
    %v674 = vadd.f32 %v566, %v673
    %v675 = vpop.f32.mrf.mxu0
    %v676 = vadd.f32 %v566, %v675
    %677 = vmatmul.bf16.gmra.mxu0 %v562
    %v678 = vpop.f32.mrf.mxu0
    %v679 = vadd.f32 %v566, %v678
    %v680 = vpop.f32.mrf.mxu0
    %v681 = vadd.f32 %v566, %v680
    %682 = vdwg.mxu0
    %683 = vmatpush.bf16.msra.mxu0 %v647
    %684 = vmatpush.bf16.msra.mxu0 %v646
    %685 = vmatpush.bf16.msra.mxu0 %v645
    %686 = vmatpush.bf16.msra.mxu0 %v644
    %687 = vmatpush.bf16.msra.mxu0 %v643
    %688 = vmatpush.bf16.msra.mxu0 %v642
    %689 = vmatpush.bf16.msra.mxu0 %v641
    %690 = vmatpush.bf16.msra.mxu0 %v640
    %691 = vmatmul.bf16.gmra.mxu0 %v561
    %v692 = vpop.f32.mrf.mxu0
    %v693 = vadd.f32 %v674, %v692
    %v694 = vpop.f32.mrf.mxu0
    %v695 = vadd.f32 %v676, %v694
    %696 = vmatmul.bf16.gmra.mxu0 %v563
    %v697 = vpop.f32.mrf.mxu0
    %v698 = vadd.f32 %v679, %v697
    %v699 = vpop.f32.mrf.mxu0
    %v700 = vadd.f32 %v681, %v699
    %701 = vdwg.mxu0
    %v702 = vpack.c.bf16 %v693, %v693
    %v703 = vpack.c.bf16 %v695, %v695
    %v704 = vpack.c.bf16 %v698, %v698
    %v705 = vpack.c.bf16 %v700, %v700
    %706 = vst [vmem:[#allocation10] sm:$0xf] %v702
    %707 = vst [vmem:[#allocation10 + $0x4] sm:$0xf] %v703
    %708 = vst [vmem:[#allocation10 + $0x8] sm:$0xf] %v704
    %709 = vst [vmem:[#allocation10 + $0xc] sm:$0xf] %v705
    // Predicated region
    $region38: #{tpu_custom_call.1} parent=1 // pred_check
      _
    $region39: #{tpu_custom_call.1} parent=1 // pred_check_branch
      %711 = sbr.rel (0) target = $region41
    $region40: #{tpu_custom_call.1} parent=1 // pred_region
      %713 = vsyncadd [#allocation4], 0
      %s714 = sshll.u32 [#allocation10], 4
      %s715 = int_to_ptr.vmem [resolvable:$true] %s714
      %s716 = sshll.u32 %s5, 4
      %s717 = int_to_ptr.hbm [resolvable:$true] %s716
      %722 = dma.vmem_to_hbm [thread:$0]  %s715, 256, %s717, [#allocation4], 64, 64, 4
    $region41: #{tpu_custom_call.1} parent=1 // pred_fallthru
      _
    // Predicated region
    $region42: #{tpu_custom_call.1} parent=1 // pred_check
      _
    $region43: #{tpu_custom_call.1} parent=1 // pred_check_branch
      %724 = sbr.rel (0) target = $region45
    $region44: #{tpu_custom_call.1} parent=1 // pred_region
      %726 = dma.done [#allocation4], 256
    $region45: #{tpu_custom_call.1} parent=1 // pred_fallthru
      _
    %727 = vsyncpa [#allocation3], 1
    %728 = vsyncpa [#allocation6], 1
    %729 = vsyncpa [#allocation9], 1
    %730 = vsyncpa [#allocation4], 1

</llo_original>
